<compile_context>
chip_gen: v7x
topology: tpu7x:2x2x1
jax: 0.10.0
libtpu: 0.0.40
codegen_flags: <defaults>
</compile_context>

<pallas_src>
import functools
import math

import numpy as np
import jax
import jax.numpy as jnp
from jax.experimental import pallas as pl
from jax.experimental.pallas import tpu as pltpu


def freq_aware_kernel(x_ref, a_ref, w_ref, gamma_ref, beta_ref, o_ref, zr_ref):
    """One output-channel block per grid step.

    x_ref:     (Cin, B*T)    compute dtype, channel-major with batch folded into time
    a_ref:     (T, T)        compute dtype tremor-band time-filter matrix
    w_ref:     (tCout, Cin)  compute dtype 1x1-conv weights for this block
    gamma_ref: (1, tCout, 1) f32 BN scale
    beta_ref:  (1, tCout, 1) f32 BN shift
    o_ref:     (B, tCout, T) output block (module layout)
    zr_ref:    (B*tCout, T)  VMEM scratch in the compute dtype
    """
    T = a_ref.shape[0]
    tCout = w_ref.shape[0]
    BT = x_ref.shape[1]
    B = BT // T

    # MXU matmul #1: 1x1 conv (channel mixing) with lane-dense N = B*T, f32 accumulation.
    z = jnp.dot(w_ref[...], x_ref[...], preferred_element_type=jnp.float32)   # (tCout, B*T)
    z = z.astype(zr_ref.dtype)

    # Relayout (channel, batch*time) -> (batch*channel, time): B static slice copies into a
    # block-sized VMEM scratch; each store covers tCout (>= 8) full sublanes.
    for b in range(B):
        zr_ref[b * tCout:(b + 1) * tCout, :] = z[:, b * T:(b + 1) * T]

    # MXU matmul #2: tremor-band time filter for every (batch, channel) row of this block.
    f = jnp.dot(zr_ref[...], a_ref[...], preferred_element_type=jnp.float32)  # (B*tCout, T) f32
    f = f.reshape(B, tCout, T)   # leading-dim split on sublane-aligned groups (tCout % 8 == 0)

    # Fused training-mode BatchNorm1d (biased variance over batch*time) + ReLU, f32 epilogue.
    # Conv bias omitted: cancelled exactly by the per-channel mean subtraction below.
    inv_n = 1.0 / float(B * T)
    mean = jnp.sum(jnp.sum(f, axis=2, keepdims=True), axis=0, keepdims=True) * inv_n
    ex2 = jnp.sum(jnp.sum(f * f, axis=2, keepdims=True), axis=0, keepdims=True) * inv_n
    var = jnp.maximum(ex2 - mean * mean, 0.0)                 # guard cancellation (bf16 path)
    scale = gamma_ref[...] * jax.lax.rsqrt(var + 1e-5)        # fold gamma into the scale
    shift = beta_ref[...] - mean * scale
    o_ref[...] = jnp.maximum(f * scale + shift, 0.0).astype(o_ref.dtype)      # single store


@functools.lru_cache(maxsize=None)
def _tremor_filter(time_points, fs, band, dtype_name):
    """Real (T, T) matrix A with  x @ A == irfft(rfft(x) * (1 + 0.5*mask))  along time.

    Built once per (T, fs, band, dtype) on host in float64 (O(T^2 log T), FFT of identity)
    and cached as a device-resident constant — never rebuilt or re-uploaded per forward."""
    T = time_points
    freqs = np.fft.rfftfreq(T, d=1.0 / fs)
    mask = ((freqs >= band[0]) & (freqs <= band[1])).astype(np.float64)
    scale = 1.0 + 0.5 * mask
    eye = np.eye(T, dtype=np.float64)
    A = np.fft.irfft(np.fft.rfft(eye, axis=1) * scale[None, :], n=T, axis=1)
    return jnp.asarray(A, dtype=jnp.dtype(dtype_name))


def _pick_cout_tile(cout):
    # Two sublane-aligned (multiple-of-8) Cout blocks when possible so the "parallel" grid
    # axis can be sharded across v7x's 2 TensorCores; otherwise a single block.
    if cout >= 16 and cout % 16 == 0:
        return cout // 2
    return cout


def frequency_aware_forward(x, conv_w, conv_b, gamma, beta, fs=100, band=(3, 7),
                            compute_dtype=jnp.bfloat16, out_dtype=jnp.float32):
    """x: (B, Cin, T) -> (B, Cout, T). Matches the PyTorch module (training-mode BN).

    conv_b is ignored: training-mode BatchNorm1d subtracts the per-channel mean over
    (batch, time), so a per-channel constant cancels exactly. If eval-mode running
    statistics were ever used, the bias would have to be re-introduced."""
    B, Cin, T = x.shape
    Cout = conv_w.shape[0]
    del conv_b  # cancels exactly under batch-statistics BN (documented assumption)

    cdt = jnp.dtype(compute_dtype)
    A = _tremor_filter(int(T), float(fs), (float(band[0]), float(band[1])), cdt.name)

    # (B, Cin, T) -> (Cin, B*T): XLA-side layout plumbing so the 1x1 conv is a single
    # lane-dense (N = B*T) MXU matmul inside the kernel.
    xT = jnp.transpose(x, (1, 0, 2)).reshape(Cin, B * T).astype(cdt)
    W = conv_w.reshape(Cout, Cin).astype(cdt)
    g = gamma.reshape(1, Cout, 1).astype(jnp.float32)
    bt = beta.reshape(1, Cout, 1).astype(jnp.float32)

    tCout = _pick_cout_tile(Cout)
    n_blk = Cout // tCout

    # VMEM budget estimate, capped by the actual chip's VMEM (valid on v7x's 64 MiB too).
    itm = cdt.itemsize
    vmem_need = ((Cin * B * T + T * T + Cout * Cin) * itm          # resident inputs
                 + (B * tCout * T) * itm                           # relayout scratch
                 + (B * tCout * T) * jnp.dtype(out_dtype).itemsize # output block
                 + 2 * Cout * 4)                                   # gamma/beta
    try:
        vmem_cap = int(getattr(pltpu.get_tpu_info(), "vmem_capacity_bytes", 64 * 2**20))
    except Exception:
        vmem_cap = 64 * 2**20
    vmem_limit = int(min(max(4 * vmem_need, 16 * 2**20), int(0.8 * vmem_cap)))

    grid_spec = pltpu.PrefetchScalarGridSpec(
        num_scalar_prefetch=0,
        grid=(n_blk,),
        in_specs=[
            pl.BlockSpec((Cin, B * T), lambda j: (0, 0)),       # x^T: resident across blocks
            pl.BlockSpec((T, T), lambda j: (0, 0)),             # A:   resident across blocks
            pl.BlockSpec((tCout, Cin), lambda j: (j, 0)),       # W:   per Cout block
            pl.BlockSpec((1, tCout, 1), lambda j: (0, j, 0)),   # gamma
            pl.BlockSpec((1, tCout, 1), lambda j: (0, j, 0)),   # beta
        ],
        out_specs=pl.BlockSpec((B, tCout, T), lambda j: (0, j, 0)),
        scratch_shapes=[pltpu.VMEM((B * tCout, T), cdt)],
    )

    out = pl.pallas_call(
        freq_aware_kernel,
        out_shape=jax.ShapeDtypeStruct((B, Cout, T), out_dtype),
        grid_spec=grid_spec,
        compiler_params=pltpu.CompilerParams(
            dimension_semantics=("parallel",),   # Cout blocks are fully independent
            vmem_limit_bytes=vmem_limit,
        ),
    )(xT, A, W, g, bt)
    return out   # already in module layout (B, Cout, T)


def reference_forward(x, conv_w, conv_b, gamma, beta, fs=100, band=(3, 7)):
    """Pure-JAX reference mirroring the PyTorch module (training-mode BN, includes bias)."""
    B, Cin, T = x.shape
    xf = jnp.fft.rfft(x, axis=2)
    freqs = jnp.fft.rfftfreq(T, d=1.0 / fs)
    mask = ((freqs >= band[0]) & (freqs <= band[1])).astype(jnp.float32)
    ex = jnp.fft.irfft(xf * (1.0 + 0.5 * mask)[None, None, :], n=T, axis=2)
    f = jnp.einsum("oc,bct->bot", conv_w, ex) + conv_b[None, :, None]
    mean = jnp.mean(f, axis=(0, 2), keepdims=True)
    var = jnp.mean((f - mean) ** 2, axis=(0, 2), keepdims=True)
    fn = (f - mean) / jnp.sqrt(var + 1e-5) * gamma[None, :, None] + beta[None, :, None]
    return jnp.maximum(fn, 0.0)


if __name__ == "__main__":
    B, Cin, Cout, T = 2, 4, 16, 16
    key = jax.random.PRNGKey(0)
    kx, kw, kb, kg, kbe = jax.random.split(key, 5)

    x = jax.random.normal(kx, (B, Cin, T), dtype=jnp.float32)
    # Conv1d(in, out, kernel_size=1) params: weight (Cout, Cin, 1) -> squeezed to (Cout, Cin)
    bound = 1.0 / math.sqrt(Cin)
    conv_w = jax.random.uniform(kw, (Cout, Cin), minval=-bound, maxval=bound, dtype=jnp.float32)
    conv_b = jax.random.uniform(kb, (Cout,), minval=-bound, maxval=bound, dtype=jnp.float32)
    gamma = jax.random.uniform(kg, (Cout,), minval=0.5, maxval=1.5, dtype=jnp.float32)
    beta = 0.1 * jax.random.normal(kbe, (Cout,), dtype=jnp.float32)

    ref = jax.block_until_ready(reference_forward(x, conv_w, conv_b, gamma, beta))

    # Strict check: f32 compute path (same operands as the reference).
    out_f32 = jax.block_until_ready(
        frequency_aware_forward(x, conv_w, conv_b, gamma, beta, compute_dtype=jnp.float32))
    assert out_f32.shape == (B, Cout, T)
    assert jnp.allclose(out_f32, ref, atol=1e-3, rtol=1e-3), "f32 kernel mismatch vs reference"

    # Default path: bf16 MXU operands, f32 accumulation + f32 BN epilogue (loose smoke check).
    out_bf16 = jax.block_until_ready(frequency_aware_forward(x, conv_w, conv_b, gamma, beta))
    assert out_bf16.shape == (B, Cout, T)
    assert bool(jnp.all(jnp.isfinite(out_bf16)))
    assert jnp.allclose(out_bf16, ref, atol=2e-1, rtol=1e-1), "bf16 kernel mismatch vs reference"

    print("KERNEL_OK")
</pallas_src>

<mosaic_0001>
module attributes {stable_mosaic.version = 11 : i64} {
  func.func @freq_aware_kernel(%arg0: i32, %arg1: memref<4x32xf32, #tpu.memory_space<vmem>>, %arg2: memref<16x16xf32, #tpu.memory_space<vmem>>, %arg3: memref<8x4xf32, #tpu.memory_space<vmem>>, %arg4: memref<1x8x1xf32, #tpu.memory_space<vmem>>, %arg5: memref<1x8x1xf32, #tpu.memory_space<vmem>>, %arg6: memref<2x8x16xf32, #tpu.memory_space<vmem>>, %arg7: memref<16x16xf32, #tpu.memory_space<vmem>>) attributes {dimension_semantics = [#tpu.dimension_semantics<parallel>], iteration_bounds = array<i64: 2>, scalar_prefetch = 0 : i64, scratch_operands = 1 : i64, tpu.core_type = #tpu.core_type<tc>, window_params = [{pipeline_mode = #tpu.pipeline_mode<synchronous>, transform_indices = @transform_0, window_bounds = array<i64: 4, 32>}, {pipeline_mode = #tpu.pipeline_mode<synchronous>, transform_indices = @transform_1, window_bounds = array<i64: 16, 16>}, {transform_indices = @transform_2, window_bounds = array<i64: 8, 4>}, {transform_indices = @transform_3, window_bounds = array<i64: 1, 8, 1>}, {transform_indices = @transform_4, window_bounds = array<i64: 1, 8, 1>}, {transform_indices = @transform_5, window_bounds = array<i64: 2, 8, 16>}]} {
    %c0 = arith.constant 0 : index
    %c0_0 = arith.constant 0 : index
    %0 = vector.load %arg3[%c0, %c0_0] : memref<8x4xf32, #tpu.memory_space<vmem>>, vector<8x4xf32>
    %c0_1 = arith.constant 0 : index
    %c0_2 = arith.constant 0 : index
    %1 = vector.load %arg1[%c0_1, %c0_2] : memref<4x32xf32, #tpu.memory_space<vmem>>, vector<4x32xf32>
    %cst = arith.constant dense<0.000000e+00> : vector<8x32xf32>
    %2 = tpu.matmul %0, %1, %cst {dimension_numbers = #tpu.dot_dimension_numbers<[1], [0], [0], [1], [0, 0, 1, 1], [], []>} : vector<8x4xf32>, vector<4x32xf32>, vector<8x32xf32> -> vector<8x32xf32>
    %3 = vector.extract_strided_slice %2 {offsets = [0, 0], sizes = [8, 16], strides = [1, 1]} : vector<8x32xf32> to vector<8x16xf32>
    %c0_3 = arith.constant 0 : index
    %c0_4 = arith.constant 0 : index
    %4 = vector.load %arg7[%c0_3, %c0_4] : memref<16x16xf32, #tpu.memory_space<vmem>>, vector<8x16xf32>
    tpu.vector_store %arg7[%c0_3, %c0_4], %3 {strides = array<i32>} : memref<16x16xf32, #tpu.memory_space<vmem>>, vector<8x16xf32>,
    %5 = vector.extract_strided_slice %2 {offsets = [0, 16], sizes = [8, 16], strides = [1, 1]} : vector<8x32xf32> to vector<8x16xf32>
    %c8 = arith.constant 8 : index
    %c0_5 = arith.constant 0 : index
    %6 = vector.load %arg7[%c8, %c0_5] : memref<16x16xf32, #tpu.memory_space<vmem>>, vector<8x16xf32>
    tpu.vector_store %arg7[%c8, %c0_5], %5 {strides = array<i32>} : memref<16x16xf32, #tpu.memory_space<vmem>>, vector<8x16xf32>,
    %c0_6 = arith.constant 0 : index
    %c0_7 = arith.constant 0 : index
    %7 = vector.load %arg7[%c0_6, %c0_7] : memref<16x16xf32, #tpu.memory_space<vmem>>, vector<16x16xf32>
    %c0_8 = arith.constant 0 : index
    %c0_9 = arith.constant 0 : index
    %8 = vector.load %arg2[%c0_8, %c0_9] : memref<16x16xf32, #tpu.memory_space<vmem>>, vector<16x16xf32>
    %cst_10 = arith.constant dense<0.000000e+00> : vector<16x16xf32>
    %9 = tpu.matmul %7, %8, %cst_10 {dimension_numbers = #tpu.dot_dimension_numbers<[1], [0], [0], [1], [0, 0, 1, 1], [], []>} : vector<16x16xf32>, vector<16x16xf32>, vector<16x16xf32> -> vector<16x16xf32>
    %10 = vector.shape_cast %9 : vector<16x16xf32> to vector<2x8x16xf32>
    %cst_11 = arith.constant dense<0.000000e+00> : vector<2x8xf32>
    %11 = vector.multi_reduction <add>, %10, %cst_11 [2] : vector<2x8x16xf32> to vector<2x8xf32>
    %12 = vector.shape_cast %11 : vector<2x8xf32> to vector<2x8x1xf32>
    %cst_12 = arith.constant dense<0.000000e+00> : vector<8x1xf32>
    %13 = vector.multi_reduction <add>, %12, %cst_12 [0] : vector<2x8x1xf32> to vector<8x1xf32>
    %14 = vector.shape_cast %13 : vector<8x1xf32> to vector<1x8x1xf32>
    %cst_13 = arith.constant 3.125000e-02 : f32
    %15 = vector.broadcast %cst_13 : f32 to vector<1x8x1xf32>
    %16 = arith.mulf %14, %15 : vector<1x8x1xf32>
    %17 = arith.mulf %10, %10 : vector<2x8x16xf32>
    %cst_14 = arith.constant dense<0.000000e+00> : vector<2x8xf32>
    %18 = vector.multi_reduction <add>, %17, %cst_14 [2] : vector<2x8x16xf32> to vector<2x8xf32>
    %19 = vector.shape_cast %18 : vector<2x8xf32> to vector<2x8x1xf32>
    %cst_15 = arith.constant dense<0.000000e+00> : vector<8x1xf32>
    %20 = vector.multi_reduction <add>, %19, %cst_15 [0] : vector<2x8x1xf32> to vector<8x1xf32>
    %21 = vector.shape_cast %20 : vector<8x1xf32> to vector<1x8x1xf32>
    %cst_16 = arith.constant 3.125000e-02 : f32
    %22 = vector.broadcast %cst_16 : f32 to vector<1x8x1xf32>
    %23 = arith.mulf %21, %22 : vector<1x8x1xf32>
    %24 = arith.mulf %16, %16 : vector<1x8x1xf32>
    %25 = arith.subf %23, %24 : vector<1x8x1xf32>
    %cst_17 = arith.constant 0.000000e+00 : f32
    %26 = vector.broadcast %cst_17 : f32 to vector<1x8x1xf32>
    %27 = arith.maximumf %25, %26 : vector<1x8x1xf32>
    %c0_18 = arith.constant 0 : index
    %c0_19 = arith.constant 0 : index
    %c0_20 = arith.constant 0 : index
    %28 = vector.load %arg4[%c0_18, %c0_19, %c0_20] : memref<1x8x1xf32, #tpu.memory_space<vmem>>, vector<1x8x1xf32>
    %cst_21 = arith.constant 9.99999974E-6 : f32
    %29 = vector.broadcast %cst_21 : f32 to vector<1x8x1xf32>
    %30 = arith.addf %27, %29 : vector<1x8x1xf32>
    %31 = math.rsqrt %30 : vector<1x8x1xf32>
    %32 = arith.mulf %28, %31 : vector<1x8x1xf32>
    %c0_22 = arith.constant 0 : index
    %c0_23 = arith.constant 0 : index
    %c0_24 = arith.constant 0 : index
    %33 = vector.load %arg5[%c0_22, %c0_23, %c0_24] : memref<1x8x1xf32, #tpu.memory_space<vmem>>, vector<1x8x1xf32>
    %34 = arith.mulf %16, %32 : vector<1x8x1xf32>
    %35 = arith.subf %33, %34 : vector<1x8x1xf32>
    %36 = vector.broadcast %32 : vector<1x8x1xf32> to vector<2x8x16xf32>
    %37 = arith.mulf %10, %36 : vector<2x8x16xf32>
    %38 = vector.broadcast %35 : vector<1x8x1xf32> to vector<2x8x16xf32>
    %39 = arith.addf %37, %38 : vector<2x8x16xf32>
    %cst_25 = arith.constant 0.000000e+00 : f32
    %40 = vector.broadcast %cst_25 : f32 to vector<2x8x16xf32>
    %41 = arith.maximumf %39, %40 : vector<2x8x16xf32>
    %c0_26 = arith.constant 0 : index
    %c0_27 = arith.constant 0 : index
    %c0_28 = arith.constant 0 : index
    %42 = vector.load %arg6[%c0_26, %c0_27, %c0_28] : memref<2x8x16xf32, #tpu.memory_space<vmem>>, vector<2x8x16xf32>
    tpu.vector_store %arg6[%c0_26, %c0_27, %c0_28], %41 {strides = array<i32>} : memref<2x8x16xf32, #tpu.memory_space<vmem>>, vector<2x8x16xf32>,
    return
  }
  func.func @transform_0(%arg0: i32) -> (i32, i32) {
    %c0_i32 = arith.constant 0 : i32
    %c0_i32_0 = arith.constant 0 : i32
    %c0_i32_1 = arith.constant 0 : i32
    return %c0_i32, %c0_i32_0 : i32, i32
  }
  func.func @transform_1(%arg0: i32) -> (i32, i32) {
    %c0_i32 = arith.constant 0 : i32
    %c0_i32_0 = arith.constant 0 : i32
    %c0_i32_1 = arith.constant 0 : i32
    return %c0_i32, %c0_i32_0 : i32, i32
  }
  func.func @transform_2(%arg0: i32) -> (i32, i32) {
    %c0_i32 = arith.constant 0 : i32
    %c0_i32_0 = arith.constant 0 : i32
    return %arg0, %c0_i32 : i32, i32
  }
  func.func @transform_3(%arg0: i32) -> (i32, i32, i32) {
    %c0_i32 = arith.constant 0 : i32
    %c0_i32_0 = arith.constant 0 : i32
    %c0_i32_1 = arith.constant 0 : i32
    return %c0_i32, %arg0, %c0_i32_0 : i32, i32, i32
  }
  func.func @transform_4(%arg0: i32) -> (i32, i32, i32) {
    %c0_i32 = arith.constant 0 : i32
    %c0_i32_0 = arith.constant 0 : i32
    %c0_i32_1 = arith.constant 0 : i32
    return %c0_i32, %arg0, %c0_i32_0 : i32, i32, i32
  }
  func.func @transform_5(%arg0: i32) -> (i32, i32, i32) {
    %c0_i32 = arith.constant 0 : i32
    %c0_i32_0 = arith.constant 0 : i32
    %c0_i32_1 = arith.constant 0 : i32
    return %c0_i32, %arg0, %c0_i32_0 : i32, i32, i32
  }
}

</mosaic_0001>

<llo_original>
// kernel: tpu_custom_call.1
$region0: #{tpu_custom_call.1}
  #allocation0 [shape = 'u32[]', space=smem, size = 0x4, offset = 0x4, fixed_abs, tag = 'smem constant byte address 0x4 - core index']
  #allocation1 [shape = 'u32[144,128]{1,0:T(1,128)}', space=vmem, size = 0x12000, scoped, tag = 'internal scratch']
  #allocation2 [shape = 'f32[16,16]{1,0:T(8,128)}', space=vmem, size = 0x2000, scoped, tag = 'scratch operand']
  %s0 = inlined_call_operand.vmem [shape: f32[4,32], index: 0, kind: input, shape index: {}]
  %s1 = inlined_call_operand.vmem [shape: f32[16,16], index: 1, kind: input, shape index: {}]
  %s2 = inlined_call_operand.vmem [shape: f32[16,4], index: 2, kind: input, shape index: {}]
  %s3 = inlined_call_operand.vmem [shape: f32[1,16,1], index: 3, kind: input, shape index: {}]
  %s4 = inlined_call_operand.vmem [shape: f32[1,16,1], index: 4, kind: input, shape index: {}]
  %s5 = inlined_call_operand.hbm [shape: f32[2,16,16], index: 5, kind: output, shape index: {}]
  %s6 = sld [smem:[#allocation0]]
  $region53: #{tpu_custom_call.1} parent=0
    _
  %s8 = ssub.s32 1, %s6
  %s9 = scalar_select 0, %s8, %s6
  $region1: #{tpu_custom_call.1} parent=0
    #allocation3 [shape = 'u8[16384]{0}', space=vmem, size = 0x4000, scoped, tag = 'output window, operand 0']
    #allocation4 [shape = 's32[2]{0}', space=sflag, size = 0x8, scoped, tag = 'scoped memory for tpu_custom_call.1']
    %10 = vsyncpa [#allocation4], 0
    %s11 = scalar_lea.sflag [#allocation4], 1
    %12 = vsyncpa %s11, 0
    loop: start=0, step=1, limit=4
    $region2: #{tpu_custom_call.1} parent=1 // loop_pre_header
      _
    $region3: #{tpu_custom_call.1} parent=1 // loop_header
      %s14 = sphi 0, %s18
      %p15 = scmp.ge.s32.totalorder %s14, 4
      %s22 = sphi 0, %s22
      %s24 = sphi 0, %s22
      %s25 = sphi 0, %s24
      %s39 = sphi 0, %s25
      %s43 = sphi 0, %s43
      %s45 = sphi 0, %s43
      %s46 = sphi 0, %s45
      %s60 = sphi 0, %s46
      %s66 = sphi 0, %s68
      %s69 = sphi 0, %s66
      %s70 = sphi 0, %s69
      %s86 = sphi 0, %s70
      %s92 = sphi 0, %s94
      %s95 = sphi 0, %s92
      %s96 = sphi 0, %s95
      %s112 = sphi 0, %s96
      %s118 = sphi 0, %s120
      %s121 = sphi 0, %s118
      %s122 = sphi 0, %s121
      %s138 = sphi 0, %s122
      %s144 = sphi 0, %s146
      %s147 = sphi 0, %s144
      %s148 = sphi 0, %s147
      %s164 = sphi 0, %s148
    $region4: #{tpu_custom_call.1} parent=1 // loop_header_branch
      %17 = sbr.rel (%p15) target = $region8
    $region5: #{tpu_custom_call.1} parent=1 // loop_body
      %s19 = ssub.s32 %s14, 1
      %s20 = ssub.s32 %s14, 2
      %s21 = sadd.s32 %s14, 1
      %s23 = sadd.s32 %s22, 1
      %p26 = scmp.eq.s32.totalorder %s14, 1
      %p27 = scmp.ne.s32.totalorder %s22, %s24
      %p28 = scmp.eq.s32.totalorder %s14, 0
      %p29 = por %p27, %p28
      %p30 = scmp.ne.s32.totalorder %s22, %s24
      %p31 = scmp.eq.s32.totalorder %s19, 1
      %p32 = por %p30, %p31
      %p33 = scmp.ne.s32.totalorder %s24, %s25
      %p34 = scmp.eq.s32.totalorder %s19, 0
      %p35 = por %p33, %p34
      %p36 = scmp.ne.s32.totalorder %s24, %s25
      %p37 = scmp.eq.s32.totalorder %s20, 1
      %p38 = por %p36, %p37
      %p40 = scmp.ne.s32.totalorder %s25, %s39
      %p41 = scmp.eq.s32.totalorder %s20, 0
      %p42 = por %p40, %p41
      %s44 = sadd.s32 %s43, 1
      %p47 = scmp.eq.s32.totalorder %s14, 1
      %p48 = scmp.ne.s32.totalorder %s43, %s45
      %p49 = scmp.eq.s32.totalorder %s14, 0
      %p50 = por %p48, %p49
      %p51 = scmp.ne.s32.totalorder %s43, %s45
      %p52 = scmp.eq.s32.totalorder %s19, 1
      %p53 = por %p51, %p52
      %p54 = scmp.ne.s32.totalorder %s45, %s46
      %p55 = scmp.eq.s32.totalorder %s19, 0
      %p56 = por %p54, %p55
      %p57 = scmp.ne.s32.totalorder %s45, %s46
      %p58 = scmp.eq.s32.totalorder %s20, 1
      %p59 = por %p57, %p58
      %p61 = scmp.ne.s32.totalorder %s46, %s60
      %p62 = scmp.eq.s32.totalorder %s20, 0
      %p63 = por %p61, %p62
      %s64 = ssub.s32 %s14, %s21
      %p65 = scmp.eq.s32.totalorder %s64, 0
      %s67 = sadd.s32 %s66, 1
      %s68 = scalar_select %p65, %s66, %s67
      %p71 = pneg %p65
      %p72 = scmp.eq.s32.totalorder %s14, 1
      %p73 = por %p71, %p72
      %p74 = scmp.ne.s32.totalorder %s66, %s69
      %p75 = scmp.eq.s32.totalorder %s14, 0
      %p76 = por %p74, %p75
      %p77 = scmp.ne.s32.totalorder %s66, %s69
      %p78 = scmp.eq.s32.totalorder %s19, 1
      %p79 = por %p77, %p78
      %p80 = scmp.ne.s32.totalorder %s69, %s70
      %p81 = scmp.eq.s32.totalorder %s19, 0
      %p82 = por %p80, %p81
      %p83 = scmp.ne.s32.totalorder %s69, %s70
      %p84 = scmp.eq.s32.totalorder %s20, 1
      %p85 = por %p83, %p84
      %p87 = scmp.ne.s32.totalorder %s70, %s86
      %p88 = scmp.eq.s32.totalorder %s20, 0
      %p89 = por %p87, %p88
      %s90 = ssub.s32 %s14, %s21
      %p91 = scmp.eq.s32.totalorder %s90, 0
      %s93 = sadd.s32 %s92, 1
      %s94 = scalar_select %p91, %s92, %s93
      %p97 = pneg %p91
      %p98 = scmp.eq.s32.totalorder %s14, 1
      %p99 = por %p97, %p98
      %p100 = scmp.ne.s32.totalorder %s92, %s95
      %p101 = scmp.eq.s32.totalorder %s14, 0
      %p102 = por %p100, %p101
      %p103 = scmp.ne.s32.totalorder %s92, %s95
      %p104 = scmp.eq.s32.totalorder %s19, 1
      %p105 = por %p103, %p104
      %p106 = scmp.ne.s32.totalorder %s95, %s96
      %p107 = scmp.eq.s32.totalorder %s19, 0
      %p108 = por %p106, %p107
      %p109 = scmp.ne.s32.totalorder %s95, %s96
      %p110 = scmp.eq.s32.totalorder %s20, 1
      %p111 = por %p109, %p110
      %p113 = scmp.ne.s32.totalorder %s96, %s112
      %p114 = scmp.eq.s32.totalorder %s20, 0
      %p115 = por %p113, %p114
      %s116 = ssub.s32 %s14, %s21
      %p117 = scmp.eq.s32.totalorder %s116, 0
      %s119 = sadd.s32 %s118, 1
      %s120 = scalar_select %p117, %s118, %s119
      %p123 = pneg %p117
      %p124 = scmp.eq.s32.totalorder %s14, 1
      %p125 = por %p123, %p124
      %p126 = scmp.ne.s32.totalorder %s118, %s121
      %p127 = scmp.eq.s32.totalorder %s14, 0
      %p128 = por %p126, %p127
      %p129 = scmp.ne.s32.totalorder %s118, %s121
      %p130 = scmp.eq.s32.totalorder %s19, 1
      %p131 = por %p129, %p130
      %p132 = scmp.ne.s32.totalorder %s121, %s122
      %p133 = scmp.eq.s32.totalorder %s19, 0
      %p134 = por %p132, %p133
      %p135 = scmp.ne.s32.totalorder %s121, %s122
      %p136 = scmp.eq.s32.totalorder %s20, 1
      %p137 = por %p135, %p136
      %p139 = scmp.ne.s32.totalorder %s122, %s138
      %p140 = scmp.eq.s32.totalorder %s20, 0
      %p141 = por %p139, %p140
      %s142 = ssub.s32 %s14, %s21
      %p143 = scmp.eq.s32.totalorder %s142, 0
      %s145 = sadd.s32 %s144, 1
      %s146 = scalar_select %p143, %s144, %s145
      %p149 = pneg %p143
      %p150 = scmp.eq.s32.totalorder %s14, 1
      %p151 = por %p149, %p150
      %p152 = scmp.ne.s32.totalorder %s144, %s147
      %p153 = scmp.eq.s32.totalorder %s14, 0
      %p154 = por %p152, %p153
      %p155 = scmp.ne.s32.totalorder %s144, %s147
      %p156 = scmp.eq.s32.totalorder %s19, 1
      %p157 = por %p155, %p156
      %p158 = scmp.ne.s32.totalorder %s147, %s148
      %p159 = scmp.eq.s32.totalorder %s19, 0
      %p160 = por %p158, %p159
      %p161 = scmp.ne.s32.totalorder %s147, %s148
      %p162 = scmp.eq.s32.totalorder %s20, 1
      %p163 = por %p161, %p162
      %p165 = scmp.ne.s32.totalorder %s148, %s164
      %p166 = scmp.eq.s32.totalorder %s20, 0
      %p167 = por %p165, %p166
      %p168 = scmp.le.s32.totalorder 1, %s14
      %p169 = scmp.lt.s32.totalorder %s14, 3
      %p170 = pnand %p168, %p169
      %p171 = pneg %p170
      // Predicated region
      $region9: #{tpu_custom_call.1} parent=5 // pred_check
        _
      $region10: #{tpu_custom_call.1} parent=5 // pred_check_branch
        %173 = sbr.rel (%p170) target = $region12
      $region11: #{tpu_custom_call.1} parent=5 // pred_region
        %s174 = ssub.s32 %s14, 1
        // Predicated region
        $region13: #{tpu_custom_call.1} parent=11 // pred_check
          %p175 = pneg %p35
        $region14: #{tpu_custom_call.1} parent=11 // pred_check_branch
          %177 = sbr.rel (%p175) target = $region16
        $region15: #{tpu_custom_call.1} parent=11 // pred_region
          _
        $region16: #{tpu_custom_call.1} parent=11 // pred_fallthru
          _
        // Predicated region
        $region17: #{tpu_custom_call.1} parent=11 // pred_check
          %p178 = pneg %p56
        $region18: #{tpu_custom_call.1} parent=11 // pred_check_branch
          %180 = sbr.rel (%p178) target = $region20
        $region19: #{tpu_custom_call.1} parent=11 // pred_region
          _
        $region20: #{tpu_custom_call.1} parent=11 // pred_fallthru
          _
      $region12: #{tpu_custom_call.1} parent=5 // pred_fallthru
        _
      %p181 = scmp.lt.s32.totalorder %s14, 2
      // Predicated region
      $region21: #{tpu_custom_call.1} parent=5 // pred_check
        %p182 = pneg %p181
      $region22: #{tpu_custom_call.1} parent=5 // pred_check_branch
        %184 = sbr.rel (%p182) target = $region24
      $region23: #{tpu_custom_call.1} parent=5 // pred_region
        // Predicated region
        $region25: #{tpu_custom_call.1} parent=23 // pred_check
          %p185 = pneg %p76
        $region26: #{tpu_custom_call.1} parent=23 // pred_check_branch
          %187 = sbr.rel (%p185) target = $region28
        $region27: #{tpu_custom_call.1} parent=23 // pred_region
          %p188 = scmp.lt.s32.totalorder %s14, 1
          %s189 = scalar_select %p188, %s14, 1
          %s190 = smul.addr %s189, 8
          %s191 = scalar_lea.vmem %s2, %s190
        $region28: #{tpu_custom_call.1} parent=23 // pred_fallthru
          _
        // Predicated region
        $region29: #{tpu_custom_call.1} parent=23 // pred_check
          %p192 = pneg %p102
        $region30: #{tpu_custom_call.1} parent=23 // pred_check_branch
          %194 = sbr.rel (%p192) target = $region32
        $region31: #{tpu_custom_call.1} parent=23 // pred_region
          %p195 = scmp.lt.s32.totalorder %s14, 1
          %s196 = scalar_select %p195, %s14, 1
          %s197 = smul.addr %s196, 8
          %s198 = scalar_lea.vmem %s3, %s197
        $region32: #{tpu_custom_call.1} parent=23 // pred_fallthru
          _
        // Predicated region
        $region33: #{tpu_custom_call.1} parent=23 // pred_check
          %p199 = pneg %p128
        $region34: #{tpu_custom_call.1} parent=23 // pred_check_branch
          %201 = sbr.rel (%p199) target = $region36
        $region35: #{tpu_custom_call.1} parent=23 // pred_region
          %p202 = scmp.lt.s32.totalorder %s14, 1
          %s203 = scalar_select %p202, %s14, 1
          %s204 = smul.addr %s203, 8
          %s205 = scalar_lea.vmem %s4, %s204
        $region36: #{tpu_custom_call.1} parent=23 // pred_fallthru
          _
      $region24: #{tpu_custom_call.1} parent=5 // pred_fallthru
        _
      %p206 = scmp.le.s32.totalorder 1, %s14
      %p207 = scmp.lt.s32.totalorder %s14, 3
      %p208 = pnand %p206, %p207
      %p209 = pneg %p208
      // Predicated region
      $region37: #{tpu_custom_call.1} parent=5 // pred_check
        _
      $region38: #{tpu_custom_call.1} parent=5 // pred_check_branch
        %211 = sbr.rel (%p208) target = $region40
      $region39: #{tpu_custom_call.1} parent=5 // pred_region
        %s212 = ssub.s32 %s14, 1
        %p213 = pneg %p35
        %p214 = pneg %p32
        %p215 = pneg %p56
        %p216 = pneg %p53
        %p217 = scmp.lt.s32.totalorder %s19, 1
        %s218 = scalar_select %p217, %s19, 1
        %s219 = smul.addr %s218, 8
        %s220 = scalar_lea.vmem %s2, %s219
        %p221 = pneg %p82
        %p222 = pneg %p79
        %p223 = scmp.lt.s32.totalorder %s19, 1
        %s224 = scalar_select %p223, %s19, 1
        %s225 = smul.addr %s224, 8
        %s226 = scalar_lea.vmem %s3, %s225
        %p227 = pneg %p108
        %p228 = pneg %p105
        %p229 = scmp.lt.s32.totalorder %s19, 1
        %s230 = scalar_select %p229, %s19, 1
        %s231 = smul.addr %s230, 8
        %s232 = scalar_lea.vmem %s4, %s231
        %p233 = pneg %p134
        %p234 = pneg %p131
        %p235 = pneg %p160
        %p236 = pneg %p157
        %s237 = sand.u32 %s147, 1
        %s238 = scalar_lea.sflag [#allocation4], %s237
        %s239 = sand.u32 %s147, 1
        %s240 = smul.addr %s239, 16
        %s241 = scalar_lea.vmem [#allocation3], %s240
        %p242 = scmp.lt.s32.totalorder %s19, 1
        %s243 = scalar_select %p242, %s19, 1
        %s244 = smul.addr %s243, 8
        %s245 = scalar_lea.vmem %s2, %s244
        %p246 = scmp.lt.s32.totalorder %s19, 1
        %s247 = scalar_select %p246, %s19, 1
        %s248 = smul.addr %s247, 8
        %s249 = scalar_lea.vmem %s3, %s248
        %p250 = scmp.lt.s32.totalorder %s19, 1
        %s251 = scalar_select %p250, %s19, 1
        %s252 = smul.addr %s251, 8
        %s253 = scalar_lea.vmem %s4, %s252
        %v254 = vld [vmem:[%s245] sm:$0xff]
        %v255 = vld [vmem:[%s0] sm:$0xf]
        %vm256 = vcmask 31744
        %v258 = vsel %vm256, %v254, 0
        %vm260 = vcmask 1043456
        %v262 = vsel %vm260, %v255, 0
        %264 = vmatprep.subr.mxu0 0.0
        %265 = vmatpush1.msra.mxu0 %v262
        %266 = vmatprep.subr.mxu0 0.0
        %267 = vmatpush1.msra.mxu0 0.0
        %268 = vmatprep.subr.mxu0 0.0
        %269 = vmatpush1.msra.mxu0 0.0
        %270 = vmatprep.subr.mxu0 0.0
        %271 = vmatpush1.msra.mxu0 0.0
        %272 = vmatprep.subr.mxu0 0.0
        %273 = vmatpush1.msra.mxu0 0.0
        %274 = vmatprep.subr.mxu0 0.0
        %275 = vmatpush1.msra.mxu0 0.0
        %276 = vmatprep.subr.mxu0 0.0
        %277 = vmatpush1.msra.mxu0 0.0
        %278 = vmatprep.subr.mxu0 0.0
        %279 = vmatpush1.msra.mxu0 0.0
        %280 = vmatprep.subr.mxu0 0.0
        %281 = vmatpush1.msra.mxu0 0.0
        %282 = vmatprep.subr.mxu0 0.0
        %283 = vmatpush1.msra.mxu0 0.0
        %284 = vmatprep.subr.mxu0 0.0
        %285 = vmatpush1.msra.mxu0 0.0
        %286 = vmatprep.subr.mxu0 0.0
        %287 = vmatpush1.msra.mxu0 0.0
        %288 = vmatprep.subr.mxu0 0.0
        %289 = vmatpush1.msra.mxu0 0.0
        %290 = vmatprep.subr.mxu0 0.0
        %291 = vmatpush1.msra.mxu0 0.0
        %292 = vmatprep.subr.mxu0 0.0
        %293 = vmatpush1.msra.mxu0 0.0
        %294 = vmatprep.subr.mxu0 0.0
        %295 = vmatpush1.msra.mxu0 0.0
        %296 = vmatprep.subr.mxu0 0.0
        %297 = vmatpush1.msra.mxu0 0.0
        %298 = vmatprep.subr.mxu0 0.0
        %299 = vmatpush1.msra.mxu0 0.0
        %300 = vmatprep.subr.mxu0 0.0
        %301 = vmatpush1.msra.mxu0 0.0
        %302 = vmatprep.subr.mxu0 0.0
        %303 = vmatpush1.msra.mxu0 0.0
        %304 = vmatprep.subr.mxu0 0.0
        %305 = vmatpush1.msra.mxu0 0.0
        %306 = vmatprep.subr.mxu0 0.0
        %307 = vmatpush1.msra.mxu0 0.0
        %308 = vmatprep.subr.mxu0 0.0
        %309 = vmatpush1.msra.mxu0 0.0
        %310 = vmatprep.subr.mxu0 0.0
        %311 = vmatpush1.msra.mxu0 0.0
        %312 = vmatprep.subr.mxu0 0.0
        %313 = vmatpush1.msra.mxu0 0.0
        %314 = vmatprep.subr.mxu0 0.0
        %315 = vmatpush1.msra.mxu0 0.0
        %316 = vmatprep.subr.mxu0 0.0
        %317 = vmatpush1.msra.mxu0 0.0
        %318 = vmatprep.subr.mxu0 0.0
        %319 = vmatpush1.msra.mxu0 0.0
        %320 = vmatprep.subr.mxu0 0.0
        %321 = vmatpush1.msra.mxu0 0.0
        %322 = vmatprep.subr.mxu0 0.0
        %323 = vmatpush1.msra.mxu0 0.0
        %324 = vmatprep.subr.mxu0 0.0
        %325 = vmatpush1.msra.mxu0 0.0
        %326 = vmatprep.subr.mxu0 0.0
        %327 = vmatpush1.msra.mxu0 0.0
        %328 = vmatprep.mubr.f32.mxu0 0.0
        %329 = vmatmul.mubr.f32.gmra.mrb[0].mxu0 %v258
        %v330 = vpop.f32.mrb[0].mxu0
        %v331 = vadd.f32 0.0, %v330
        %v332 = vpop.f32.mrb[0].mxu0
        %333 = vdwg.mxu0
        %vm334 = vcmask 130048
        %335 = vst.msk [vmem:[#allocation2] sm:$0xff] %vm334, %v331
        %337 = vrot.lane.b32.xlu0 %v331, 112
        %v338 = vpop.permute.xlu0 %337
        %340 = vst.msk [vmem:[#allocation2 + $0x8] sm:$0xff] %vm334, %v338
        %v341 = vld [vmem:[#allocation2] sm:$0xff]
        %v342 = vld [vmem:[#allocation2 + $0x8] sm:$0xff]
        %v343 = vld [vmem:[%s1] sm:$0xff]
        %v344 = vld [vmem:[%s1 + $0x8] sm:$0xff]
        %v346 = vsel %vm334, %v341, 0
        %v349 = vsel %vm334, %v342, 0
        %351 = vmatprep.subr.mxu0 0.0
        %352 = vmatpush1.msra.mxu0 %v343
        %353 = vmatprep.subr.mxu0 0.0
        %354 = vmatpush1.msra.mxu0 %v344
        %355 = vmatprep.subr.mxu0 0.0
        %356 = vmatpush1.msra.mxu0 0.0
        %357 = vmatprep.subr.mxu0 0.0
        %358 = vmatpush1.msra.mxu0 0.0
        %359 = vmatprep.subr.mxu0 0.0
        %360 = vmatpush1.msra.mxu0 0.0
        %361 = vmatprep.subr.mxu0 0.0
        %362 = vmatpush1.msra.mxu0 0.0
        %363 = vmatprep.subr.mxu0 0.0
        %364 = vmatpush1.msra.mxu0 0.0
        %365 = vmatprep.subr.mxu0 0.0
        %366 = vmatpush1.msra.mxu0 0.0
        %367 = vmatprep.subr.mxu0 0.0
        %368 = vmatpush1.msra.mxu0 0.0
        %369 = vmatprep.subr.mxu0 0.0
        %370 = vmatpush1.msra.mxu0 0.0
        %371 = vmatprep.subr.mxu0 0.0
        %372 = vmatpush1.msra.mxu0 0.0
        %373 = vmatprep.subr.mxu0 0.0
        %374 = vmatpush1.msra.mxu0 0.0
        %375 = vmatprep.subr.mxu0 0.0
        %376 = vmatpush1.msra.mxu0 0.0
        %377 = vmatprep.subr.mxu0 0.0
        %378 = vmatpush1.msra.mxu0 0.0
        %379 = vmatprep.subr.mxu0 0.0
        %380 = vmatpush1.msra.mxu0 0.0
        %381 = vmatprep.subr.mxu0 0.0
        %382 = vmatpush1.msra.mxu0 0.0
        %383 = vmatprep.subr.mxu0 0.0
        %384 = vmatpush1.msra.mxu0 0.0
        %385 = vmatprep.subr.mxu0 0.0
        %386 = vmatpush1.msra.mxu0 0.0
        %387 = vmatprep.subr.mxu0 0.0
        %388 = vmatpush1.msra.mxu0 0.0
        %389 = vmatprep.subr.mxu0 0.0
        %390 = vmatpush1.msra.mxu0 0.0
        %391 = vmatprep.subr.mxu0 0.0
        %392 = vmatpush1.msra.mxu0 0.0
        %393 = vmatprep.subr.mxu0 0.0
        %394 = vmatpush1.msra.mxu0 0.0
        %395 = vmatprep.subr.mxu0 0.0
        %396 = vmatpush1.msra.mxu0 0.0
        %397 = vmatprep.subr.mxu0 0.0
        %398 = vmatpush1.msra.mxu0 0.0
        %399 = vmatprep.subr.mxu0 0.0
        %400 = vmatpush1.msra.mxu0 0.0
        %401 = vmatprep.subr.mxu0 0.0
        %402 = vmatpush1.msra.mxu0 0.0
        %403 = vmatprep.subr.mxu0 0.0
        %404 = vmatpush1.msra.mxu0 0.0
        %405 = vmatprep.subr.mxu0 0.0
        %406 = vmatpush1.msra.mxu0 0.0
        %407 = vmatprep.subr.mxu0 0.0
        %408 = vmatpush1.msra.mxu0 0.0
        %409 = vmatprep.subr.mxu0 0.0
        %410 = vmatpush1.msra.mxu0 0.0
        %411 = vmatprep.subr.mxu0 0.0
        %412 = vmatpush1.msra.mxu0 0.0
        %413 = vmatprep.subr.mxu0 0.0
        %414 = vmatpush1.msra.mxu0 0.0
        %415 = vmatprep.mubr.f32.mxu0 0.0
        %416 = vmatmul.mubr.f32.gmra.mrb[0].mxu0 %v346
        %v417 = vpop.f32.mrb[0].mxu0
        %v418 = vadd.f32 0.0, %v417
        %v419 = vpop.f32.mrb[0].mxu0
        %420 = vmatprep.mubr.f32.mxu0 0.0
        %421 = vmatmul.mubr.f32.gmra.mrb[0].mxu0 %v349
        %v422 = vpop.f32.mrb[0].mxu0
        %v423 = vadd.f32 0.0, %v422
        %v424 = vpop.f32.mrb[0].mxu0
        %425 = vdwg.mxu0
        %v426 = vsel %vm334, %v418, 0.0
        %427 = vadd.xlane.f32.xlu0 %v426
        %v428 = vpop.xlane.xlu0 %427
        %v429 = vsel %vm334, %v423, 0.0
        %430 = vadd.xlane.f32.xlu0 %v429
        %v431 = vpop.xlane.xlu0 %430
        %v432 = vadd.f32 %v428, %v431
        %v433 = vmul.f32 %v432, 0.03125
        %v434 = vmul.f32 %v418, %v418
        %v435 = vmul.f32 %v423, %v423
        %v436 = vsel %vm334, %v434, 0.0
        %437 = vadd.xlane.f32.xlu0 %v436
        %v438 = vpop.xlane.xlu0 %437
        %v439 = vsel %vm334, %v435, 0.0
        %440 = vadd.xlane.f32.xlu0 %v439
        %v441 = vpop.xlane.xlu0 %440
        %v442 = vadd.f32 %v438, %v441
        %v443 = vmul.f32 %v442, 0.03125
        %v444 = vmul.f32 %v433, %v433
        %v445 = vsub.f32 %v443, %v444
        %v446 = vmax.f32 %v445, 0.0
        %v447 = vld [vmem:[%s249] sm:$0xff]
        %v448 = vadd.f32 %v446, 1e-05
        %v449 = vrsqrt.pop %v448
        %v450 = vmul.f32 %v447, %v449
        %v451 = vld [vmem:[%s253] sm:$0xff]
        %v452 = vmul.f32 %v433, %v450
        %v453 = vsub.f32 %v451, %v452
        %455 = vset.pattern.permute.xlu0 0
        %456 = vperm.xlu0 %455, %v450
        %v457 = vpop.permute.xlu0 %456
        %v459 = vmul.f32 %v418, %v457
        %v460 = vmul.f32 %v423, %v457
        %462 = vset.pattern.permute.xlu0 0
        %463 = vperm.xlu0 %462, %v453
        %v464 = vpop.permute.xlu0 %463
        %v466 = vadd.f32 %v459, %v464
        %v467 = vadd.f32 %v460, %v464
        %v468 = vmax.f32 %v466, 0.0
        %v469 = vmax.f32 %v467, 0.0
        %470 = vst.msk [vmem:[%s241] sm:$0xff] %vm334, %v468
        %471 = vst.msk [vmem:[%s241 + $0x8] sm:$0xff] %vm334, %v469
        %s472 = sand.u32 %s147, 1
        %s473 = scalar_lea.sflag [#allocation4], %s472
        %s474 = sand.u32 %s147, 1
        %s475 = smul.addr %s474, 16
        %s476 = scalar_lea.vmem [#allocation3], %s475
        // Predicated region
        $region41: #{tpu_custom_call.1} parent=39 // pred_check
          %p477 = pneg %p157
        $region42: #{tpu_custom_call.1} parent=39 // pred_check_branch
          %479 = sbr.rel (%p477) target = $region44
        $region43: #{tpu_custom_call.1} parent=39 // pred_region
          %s481 = ssub.s32 256, 256
          %482 = vsyncadd %s473, %s481
          %s483 = smul.addr %s19, 128
          %s484 = scalar_lea.hbm %s5, %s483
          %s485 = sshll.u32 %s476, 4
          %s486 = int_to_ptr.vmem [resolvable:$true] %s485
          %491 = dma.vmem_to_hbm [thread:$0]  %s486, 256, %s484, %s473, 128, 256, 8
        $region44: #{tpu_custom_call.1} parent=39 // pred_fallthru
          _
      $region40: #{tpu_custom_call.1} parent=5 // pred_fallthru
        _
      %p492 = scmp.le.s32.totalorder 2, %s14
      // Predicated region
      $region45: #{tpu_custom_call.1} parent=5 // pred_check
        %p493 = pneg %p492
      $region46: #{tpu_custom_call.1} parent=5 // pred_check_branch
        %495 = sbr.rel (%p493) target = $region48
      $region47: #{tpu_custom_call.1} parent=5 // pred_region
        %s496 = ssub.s32 %s14, 2
        // Predicated region
        $region49: #{tpu_custom_call.1} parent=47 // pred_check
          %p497 = pneg %p163
        $region50: #{tpu_custom_call.1} parent=47 // pred_check_branch
          %499 = sbr.rel (%p497) target = $region52
        $region51: #{tpu_custom_call.1} parent=47 // pred_region
          %s500 = sand.u32 %s148, 1
          %s501 = scalar_lea.sflag [#allocation4], %s500
          %s502 = sand.u32 %s148, 1
          %s503 = smul.addr %s502, 16
          %s504 = scalar_lea.vmem [#allocation3], %s503
          %505 = dma.done %s501, 256
        $region52: #{tpu_custom_call.1} parent=47 // pred_fallthru
          _
      $region48: #{tpu_custom_call.1} parent=5 // pred_fallthru
        _
    $region6: #{tpu_custom_call.1} parent=1 // loop_footer
      %s18 = sadd.s32 1, %s14
    $region7: #{tpu_custom_call.1} parent=1 // loop_footer_branch
      %13 = sbr.rel target = $region3
    $region8: #{tpu_custom_call.1} parent=1 // loop_exit
      _
    %506 = vsyncpa [#allocation4], 1
    %s507 = scalar_lea.sflag [#allocation4], 1
    %508 = vsyncpa %s507, 1

</llo_original>
